<compile_context>
chip_gen: v7x
topology: tpu7x:2x2x1
jax: 0.10.0
libtpu: 0.0.40
codegen_flags: <defaults>
</compile_context>

<pallas_src>
import functools

import jax
import jax.numpy as jnp
from jax import lax
from jax.experimental import pallas as pl
from jax.experimental.pallas import tpu as pltpu

LANES = 128
SUBLANES = 8
MAX_TILE_ROWS = 8192          # 4 MiB f32 per input tile; 2 inputs x 2 bufs = 16 MiB
CHUNK_ROWS = 64               # rows per inner fori_loop chunk (keeps live vregs low)
NUM_CORE_SPLITS = 2           # "parallel" leading axis: both TCs on v7x, harmless on 1-TC
VMEM_LIMIT_BYTES = 32 * 1024 * 1024


def _cdiv(a, b):
    return -(-a // b)


def _loss_partials_kernel(shift_ref, n_ref, a_ref, b_ref, out_ref, acc_ref, *,
                          chunk_rows, steps_per_core, tile_rows):
    """shift_ref: SMEM (2,) f32  = [shift_a, shift_b]  (first elements of a, b)
    n_ref:     SMEM (1,) i32  = [n_total]
    a_ref/b_ref: VMEM (tile_rows, 128) tiles (native dtype)
    out_ref:   VMEM (1, 6, 8, 128) per-core partial sums
    acc_ref:   VMEM (6, 8, 128) f32 lane-parallel accumulators
    """
    c = pl.program_id(0)          # core-split index ("parallel")
    s = pl.program_id(1)          # reduction step   ("arbitrary")

    @pl.when(s == 0)
    def _():
        acc_ref[...] = jnp.zeros_like(acc_ref)

    s_a = shift_ref[0]
    s_b = shift_ref[1]

    # Logical (unclamped) block index.  Dummy steps (blk >= n_blocks, produced
    # when blocks don't split evenly across cores) get a base >= n_total and
    # are therefore fully masked out below.
    # NOTE: int32 index math limits supported tensors to < 2^31 elements.
    blk = c * steps_per_core + s
    n_rem_tile = n_ref[0] - blk * (tile_rows * LANES)   # i32 scalar

    g = chunk_rows // SUBLANES
    n_chunks = tile_rows // chunk_rows

    # Flat element index within one chunk (constant; hoisted out of the loop).
    idx = (lax.broadcasted_iota(jnp.int32, (chunk_rows, LANES), 0) * LANES
           + lax.broadcasted_iota(jnp.int32, (chunk_rows, LANES), 1))

    def body(ci, carry):
        acc_a, acc_b, acc_ab, acc_aa, acc_bb, acc_dd = carry
        r0 = pl.multiple_of(ci * chunk_rows, SUBLANES)
        a = a_ref[pl.ds(r0, chunk_rows), :].astype(jnp.float32)
        b = b_ref[pl.ds(r0, chunk_rows), :].astype(jnp.float32)

        rem = n_rem_tile - ci * (chunk_rows * LANES)     # i32 scalar
        valid = idx < rem                                # handles rem <= 0 too

        a_s = jnp.where(valid, a - s_a, 0.0)             # shifted + masked
        b_s = jnp.where(valid, b - s_b, 0.0)
        d = jnp.where(valid, a - b, 0.0)                 # raw diff for MSE

        def red(x):  # sublane/lane-parallel partial reduce (pure VPU adds)
            return jnp.sum(x.reshape(g, SUBLANES, LANES), axis=0)

        return (acc_a + red(a_s),
                acc_b + red(b_s),
                acc_ab + red(a_s * b_s),
                acc_aa + red(a_s * a_s),
                acc_bb + red(b_s * b_s),
                acc_dd + red(d * d))

    zero = jnp.zeros((SUBLANES, LANES), jnp.float32)
    acc = lax.fori_loop(0, n_chunks, body, (zero,) * 6,
                        unroll=min(4, n_chunks))

    for k in range(6):
        acc_ref[k] += acc[k]

    @pl.when(s == pl.num_programs(1) - 1)
    def _():
        out_ref[0] = acc_ref[...]


def weighted_regression_correlation_loss(inputs, targets, w):
    """inputs/targets: arbitrary (e.g. NCHW) arrays of identical shape."""
    n_total = inputs.size

    a = inputs.reshape(-1)
    b = targets.reshape(-1)

    # Conditioning shifts (first element of each tensor) and true element count.
    shift = jnp.stack([a[0], b[0]]).astype(jnp.float32)
    n_arr = jnp.array([n_total], dtype=jnp.int32)

    rows = _cdiv(n_total, LANES)
    rows_alloc = max(rows, SUBLANES)
    pad = rows_alloc * LANES - n_total
    if pad:
        # Only for numel % 128 != 0 (or tiny tensors); pad contents are masked
        # in-kernel so the values don't matter.
        a = jnp.pad(a, (0, pad))
        b = jnp.pad(b, (0, pad))
    a2 = a.reshape(rows_alloc, LANES)
    b2 = b.reshape(rows_alloc, LANES)

    # Tile-size selection: big tiles in multiples of the inner chunk size.
    chunk_rows = CHUNK_ROWS if rows_alloc >= CHUNK_ROWS else SUBLANES
    tile_rows = min(MAX_TILE_ROWS, (rows_alloc // chunk_rows) * chunk_rows)
    n_blocks = _cdiv(rows_alloc, tile_rows)
    steps_per_core = _cdiv(n_blocks, NUM_CORE_SPLITS)
    grid = (NUM_CORE_SPLITS, steps_per_core)

    kernel = functools.partial(
        _loss_partials_kernel,
        chunk_rows=chunk_rows,
        steps_per_core=steps_per_core,
        tile_rows=tile_rows)

    def row_block_map(c, s):
        # Clamp so dummy steps re-read the last real block; their contribution
        # is fully masked inside the kernel via the logical block index.
        return (jnp.minimum(c * steps_per_core + s, n_blocks - 1), 0)

    partials = pl.pallas_call(
        kernel,
        out_shape=jax.ShapeDtypeStruct(
            (NUM_CORE_SPLITS, 6, SUBLANES, LANES), jnp.float32),
        grid_spec=pltpu.PrefetchScalarGridSpec(
            num_scalar_prefetch=0,
            grid=grid,
            in_specs=[
                pl.BlockSpec(memory_space=pltpu.MemorySpace.SMEM),  # [sA, sB]
                pl.BlockSpec(memory_space=pltpu.MemorySpace.SMEM),  # [n_total]
                pl.BlockSpec((tile_rows, LANES), row_block_map),
                pl.BlockSpec((tile_rows, LANES), row_block_map),
            ],
            out_specs=pl.BlockSpec((1, 6, SUBLANES, LANES),
                                   lambda c, s: (c, 0, 0, 0)),
            scratch_shapes=[pltpu.VMEM((6, SUBLANES, LANES), jnp.float32)],
        ),
        compiler_params=pltpu.CompilerParams(
            dimension_semantics=("parallel", "arbitrary"),
            vmem_limit_bytes=VMEM_LIMIT_BYTES,
        ),
    )(shift, n_arr, a2, b2)

    # Tiny JAX epilogue: combine per-core partial sums into the scalar loss.
    sums = jnp.sum(partials, axis=(0, 2, 3))        # (6,)
    sa, sb, sab, sa2, sb2, sd2 = (sums[0], sums[1], sums[2],
                                  sums[3], sums[4], sums[5])
    inv_n = jnp.float32(1.0 / float(n_total))       # exact host-side 1/n

    # Shifted sums -> exact centered sums (shift cancels analytically).
    sxy = sab - sa * sb * inv_n
    sxx = sa2 - sa * sa * inv_n
    syy = sb2 - sb * sb * inv_n
    pearson = sxy / (jnp.sqrt(sxx) * jnp.sqrt(syy))

    mse = sd2 * inv_n                               # F.mse_loss, reduction='mean'

    wf = jnp.float32(w)
    return wf * (-1.0) * pearson + (1.0 - wf * mse)


def _reference_loss(inputs, targets, w):
    x = inputs - jnp.mean(inputs)
    y = targets - jnp.mean(targets)
    pearson = jnp.sum(x * y) / (jnp.sqrt(jnp.sum(x ** 2)) * jnp.sqrt(jnp.sum(y ** 2)))
    mse = jnp.mean((inputs - targets) ** 2)
    return w * -1.0 * pearson + (1.0 - w * mse)


if __name__ == "__main__":
    w = 0.5  # module hyper-parameter (deterministic, set in-script)

    key = jax.random.PRNGKey(0)
    k1, k2, k3, k4 = jax.random.split(key, 4)

    # Case 1: NCHW, numel % 128 == 0 (no host padding, no masking needed).
    inputs = jax.random.normal(k1, (2, 4, 16, 16), dtype=jnp.float32)
    targets = inputs + 0.3 * jax.random.normal(k2, (2, 4, 16, 16), dtype=jnp.float32)
    loss = jax.block_until_ready(weighted_regression_correlation_loss(inputs, targets, w))
    ref = _reference_loss(inputs, targets, w)
    assert jnp.allclose(loss, ref, rtol=1e-4, atol=1e-5), (loss, ref)

    # Case 2: odd numel (not a multiple of 128) + non-zero mean: exercises the
    # in-kernel mask path and the shifted-sum conditioning.
    inputs2 = 5.0 + jax.random.normal(k3, (2, 3, 7, 11), dtype=jnp.float32)
    targets2 = inputs2 + 0.3 * jax.random.normal(k4, (2, 3, 7, 11), dtype=jnp.float32)
    loss2 = jax.block_until_ready(weighted_regression_correlation_loss(inputs2, targets2, w))
    ref2 = _reference_loss(inputs2, targets2, w)
    assert jnp.allclose(loss2, ref2, rtol=2e-4, atol=1e-5), (loss2, ref2)

    print("KERNEL_OK")
</pallas_src>

<mosaic_0001>
module attributes {stable_mosaic.version = 11 : i64} {
  func.func @_loss_partials_kernel(%arg0: i32, %arg1: i32, %arg2: memref<2xf32, #tpu.memory_space<smem>>, %arg3: memref<1xi32, #tpu.memory_space<smem>>, %arg4: memref<16x128xf32, #tpu.memory_space<vmem>>, %arg5: memref<16x128xf32, #tpu.memory_space<vmem>>, %arg6: memref<1x6x8x128xf32, #tpu.memory_space<vmem>>, %arg7: memref<6x8x128xf32, #tpu.memory_space<vmem>>) attributes {dimension_semantics = [#tpu.dimension_semantics<parallel>, #tpu.dimension_semantics<arbitrary>], iteration_bounds = array<i64: 2, 1>, scalar_prefetch = 0 : i64, scratch_operands = 1 : i64, tpu.core_type = #tpu.core_type<tc>, window_params = [{transform_indices = @transform_0, window_bounds = array<i64: 2>}, {transform_indices = @transform_1, window_bounds = array<i64: 1>}, {transform_indices = @transform_2, window_bounds = array<i64: 16, 128>}, {transform_indices = @transform_3, window_bounds = array<i64: 16, 128>}, {transform_indices = @transform_4, window_bounds = array<i64: 1, 6, 8, 128>}]} {
    %c0_i32 = arith.constant 0 : i32
    %0 = arith.cmpi eq, %arg1, %c0_i32 : i32
    %1 = arith.extui %0 : i1 to i32
    %c0_i32_0 = arith.constant 0 : i32
    %2 = arith.cmpi ne, %1, %c0_i32_0 : i32
    scf.if %2 {
      %cst_62 = arith.constant 0.000000e+00 : f32
      %141 = vector.broadcast %cst_62 : f32 to vector<6x8x128xf32>
      %c0_63 = arith.constant 0 : index
      %c0_64 = arith.constant 0 : index
      %c0_65 = arith.constant 0 : index
      %142 = vector.load %arg7[%c0_63, %c0_64, %c0_65] : memref<6x8x128xf32, #tpu.memory_space<vmem>>, vector<6x8x128xf32>
      tpu.vector_store %arg7[%c0_63, %c0_64, %c0_65], %141 {strides = array<i32>} : memref<6x8x128xf32, #tpu.memory_space<vmem>>, vector<6x8x128xf32>,
    } else {
    }
    %c0 = arith.constant 0 : index
    %3 = memref.load %arg2[%c0] : memref<2xf32, #tpu.memory_space<smem>>
    %c1 = arith.constant 1 : index
    %4 = memref.load %arg2[%c1] : memref<2xf32, #tpu.memory_space<smem>>
    %c1_i32 = arith.constant 1 : i32
    %5 = arith.muli %arg0, %c1_i32 : i32
    %6 = arith.addi %5, %arg1 : i32
    %c0_1 = arith.constant 0 : index
    %7 = memref.load %arg3[%c0_1] : memref<1xi32, #tpu.memory_space<smem>>
    %c2048_i32 = arith.constant 2048 : i32
    %8 = arith.muli %6, %c2048_i32 : i32
    %9 = arith.subi %7, %8 : i32
    %10 = tpu.iota {dimensions = array<i32: 0>} : vector<8x128xi32>
    %c128_i32 = arith.constant 128 : i32
    %11 = vector.broadcast %c128_i32 : i32 to vector<8x128xi32>
    %12 = arith.muli %10, %11 : vector<8x128xi32>
    %13 = tpu.iota {dimensions = array<i32: 1>} : vector<8x128xi32>
    %14 = arith.addi %12, %13 : vector<8x128xi32>
    %cst = arith.constant 0.000000e+00 : f32
    %15 = vector.broadcast %cst : f32 to vector<8x128xf32>
    %c0_i32_2 = arith.constant 0 : i32
    %c8_i32 = arith.constant 8 : i32
    %16 = arith.muli %c0_i32_2, %c8_i32 : i32
    %17 = tpu.assume_multiple %16, 8 : i32
    %18 = arith.index_cast %17 : i32 to index
    %c0_3 = arith.constant 0 : index
    %19 = vector.load %arg4[%18, %c0_3] : memref<16x128xf32, #tpu.memory_space<vmem>>, vector<8x128xf32>
    %20 = arith.index_cast %17 : i32 to index
    %c0_4 = arith.constant 0 : index
    %21 = vector.load %arg5[%20, %c0_4] : memref<16x128xf32, #tpu.memory_space<vmem>>, vector<8x128xf32>
    %c1024_i32 = arith.constant 1024 : i32
    %22 = arith.muli %c0_i32_2, %c1024_i32 : i32
    %23 = arith.subi %9, %22 : i32
    %24 = vector.broadcast %23 : i32 to vector<8x128xi32>
    %25 = arith.cmpi slt, %14, %24 : vector<8x128xi32>
    %26 = vector.broadcast %3 : f32 to vector<8x128xf32>
    %27 = arith.subf %19, %26 : vector<8x128xf32>
    %cst_5 = arith.constant 0.000000e+00 : f32
    %28 = vector.broadcast %cst_5 : f32 to vector<8x128xf32>
    %29 = arith.select %25, %27, %28 : vector<8x128xi1>, vector<8x128xf32>
    %30 = vector.broadcast %4 : f32 to vector<8x128xf32>
    %31 = arith.subf %21, %30 : vector<8x128xf32>
    %cst_6 = arith.constant 0.000000e+00 : f32
    %32 = vector.broadcast %cst_6 : f32 to vector<8x128xf32>
    %33 = arith.select %25, %31, %32 : vector<8x128xi1>, vector<8x128xf32>
    %34 = arith.subf %19, %21 : vector<8x128xf32>
    %cst_7 = arith.constant 0.000000e+00 : f32
    %35 = vector.broadcast %cst_7 : f32 to vector<8x128xf32>
    %36 = arith.select %25, %34, %35 : vector<8x128xi1>, vector<8x128xf32>
    %37 = vector.shape_cast %29 : vector<8x128xf32> to vector<1x8x128xf32>
    %cst_8 = arith.constant dense<0.000000e+00> : vector<8x128xf32>
    %38 = vector.multi_reduction <add>, %37, %cst_8 [0] : vector<1x8x128xf32> to vector<8x128xf32>
    %39 = arith.addf %15, %38 : vector<8x128xf32>
    %40 = vector.shape_cast %33 : vector<8x128xf32> to vector<1x8x128xf32>
    %cst_9 = arith.constant dense<0.000000e+00> : vector<8x128xf32>
    %41 = vector.multi_reduction <add>, %40, %cst_9 [0] : vector<1x8x128xf32> to vector<8x128xf32>
    %42 = arith.addf %15, %41 : vector<8x128xf32>
    %43 = arith.mulf %29, %33 : vector<8x128xf32>
    %44 = vector.shape_cast %43 : vector<8x128xf32> to vector<1x8x128xf32>
    %cst_10 = arith.constant dense<0.000000e+00> : vector<8x128xf32>
    %45 = vector.multi_reduction <add>, %44, %cst_10 [0] : vector<1x8x128xf32> to vector<8x128xf32>
    %46 = arith.addf %15, %45 : vector<8x128xf32>
    %47 = arith.mulf %29, %29 : vector<8x128xf32>
    %48 = vector.shape_cast %47 : vector<8x128xf32> to vector<1x8x128xf32>
    %cst_11 = arith.constant dense<0.000000e+00> : vector<8x128xf32>
    %49 = vector.multi_reduction <add>, %48, %cst_11 [0] : vector<1x8x128xf32> to vector<8x128xf32>
    %50 = arith.addf %15, %49 : vector<8x128xf32>
    %51 = arith.mulf %33, %33 : vector<8x128xf32>
    %52 = vector.shape_cast %51 : vector<8x128xf32> to vector<1x8x128xf32>
    %cst_12 = arith.constant dense<0.000000e+00> : vector<8x128xf32>
    %53 = vector.multi_reduction <add>, %52, %cst_12 [0] : vector<1x8x128xf32> to vector<8x128xf32>
    %54 = arith.addf %15, %53 : vector<8x128xf32>
    %55 = arith.mulf %36, %36 : vector<8x128xf32>
    %56 = vector.shape_cast %55 : vector<8x128xf32> to vector<1x8x128xf32>
    %cst_13 = arith.constant dense<0.000000e+00> : vector<8x128xf32>
    %57 = vector.multi_reduction <add>, %56, %cst_13 [0] : vector<1x8x128xf32> to vector<8x128xf32>
    %58 = arith.addf %15, %57 : vector<8x128xf32>
    %c1_i32_14 = arith.constant 1 : i32
    %c8_i32_15 = arith.constant 8 : i32
    %59 = arith.muli %c1_i32_14, %c8_i32_15 : i32
    %60 = tpu.assume_multiple %59, 8 : i32
    %61 = arith.index_cast %60 : i32 to index
    %c0_16 = arith.constant 0 : index
    %62 = vector.load %arg4[%61, %c0_16] : memref<16x128xf32, #tpu.memory_space<vmem>>, vector<8x128xf32>
    %63 = arith.index_cast %60 : i32 to index
    %c0_17 = arith.constant 0 : index
    %64 = vector.load %arg5[%63, %c0_17] : memref<16x128xf32, #tpu.memory_space<vmem>>, vector<8x128xf32>
    %c1024_i32_18 = arith.constant 1024 : i32
    %65 = arith.muli %c1_i32_14, %c1024_i32_18 : i32
    %66 = arith.subi %9, %65 : i32
    %67 = vector.broadcast %66 : i32 to vector<8x128xi32>
    %68 = arith.cmpi slt, %14, %67 : vector<8x128xi32>
    %69 = vector.broadcast %3 : f32 to vector<8x128xf32>
    %70 = arith.subf %62, %69 : vector<8x128xf32>
    %cst_19 = arith.constant 0.000000e+00 : f32
    %71 = vector.broadcast %cst_19 : f32 to vector<8x128xf32>
    %72 = arith.select %68, %70, %71 : vector<8x128xi1>, vector<8x128xf32>
    %73 = vector.broadcast %4 : f32 to vector<8x128xf32>
    %74 = arith.subf %64, %73 : vector<8x128xf32>
    %cst_20 = arith.constant 0.000000e+00 : f32
    %75 = vector.broadcast %cst_20 : f32 to vector<8x128xf32>
    %76 = arith.select %68, %74, %75 : vector<8x128xi1>, vector<8x128xf32>
    %77 = arith.subf %62, %64 : vector<8x128xf32>
    %cst_21 = arith.constant 0.000000e+00 : f32
    %78 = vector.broadcast %cst_21 : f32 to vector<8x128xf32>
    %79 = arith.select %68, %77, %78 : vector<8x128xi1>, vector<8x128xf32>
    %80 = vector.shape_cast %72 : vector<8x128xf32> to vector<1x8x128xf32>
    %cst_22 = arith.constant dense<0.000000e+00> : vector<8x128xf32>
    %81 = vector.multi_reduction <add>, %80, %cst_22 [0] : vector<1x8x128xf32> to vector<8x128xf32>
    %82 = arith.addf %39, %81 : vector<8x128xf32>
    %83 = vector.shape_cast %76 : vector<8x128xf32> to vector<1x8x128xf32>
    %cst_23 = arith.constant dense<0.000000e+00> : vector<8x128xf32>
    %84 = vector.multi_reduction <add>, %83, %cst_23 [0] : vector<1x8x128xf32> to vector<8x128xf32>
    %85 = arith.addf %42, %84 : vector<8x128xf32>
    %86 = arith.mulf %72, %76 : vector<8x128xf32>
    %87 = vector.shape_cast %86 : vector<8x128xf32> to vector<1x8x128xf32>
    %cst_24 = arith.constant dense<0.000000e+00> : vector<8x128xf32>
    %88 = vector.multi_reduction <add>, %87, %cst_24 [0] : vector<1x8x128xf32> to vector<8x128xf32>
    %89 = arith.addf %46, %88 : vector<8x128xf32>
    %90 = arith.mulf %72, %72 : vector<8x128xf32>
    %91 = vector.shape_cast %90 : vector<8x128xf32> to vector<1x8x128xf32>
    %cst_25 = arith.constant dense<0.000000e+00> : vector<8x128xf32>
    %92 = vector.multi_reduction <add>, %91, %cst_25 [0] : vector<1x8x128xf32> to vector<8x128xf32>
    %93 = arith.addf %50, %92 : vector<8x128xf32>
    %94 = arith.mulf %76, %76 : vector<8x128xf32>
    %95 = vector.shape_cast %94 : vector<8x128xf32> to vector<1x8x128xf32>
    %cst_26 = arith.constant dense<0.000000e+00> : vector<8x128xf32>
    %96 = vector.multi_reduction <add>, %95, %cst_26 [0] : vector<1x8x128xf32> to vector<8x128xf32>
    %97 = arith.addf %54, %96 : vector<8x128xf32>
    %98 = arith.mulf %79, %79 : vector<8x128xf32>
    %99 = vector.shape_cast %98 : vector<8x128xf32> to vector<1x8x128xf32>
    %cst_27 = arith.constant dense<0.000000e+00> : vector<8x128xf32>
    %100 = vector.multi_reduction <add>, %99, %cst_27 [0] : vector<1x8x128xf32> to vector<8x128xf32>
    %101 = arith.addf %58, %100 : vector<8x128xf32>
    %c2_i32 = arith.constant 2 : i32
    %c0_28 = arith.constant 0 : index
    %c0_29 = arith.constant 0 : index
    %c0_30 = arith.constant 0 : index
    %102 = vector.load %arg7[%c0_28, %c0_29, %c0_30] : memref<6x8x128xf32, #tpu.memory_space<vmem>>, vector<1x8x128xf32>
    %103 = vector.shape_cast %102 : vector<1x8x128xf32> to vector<8x128xf32>
    %104 = arith.addf %103, %82 : vector<8x128xf32>
    %c0_31 = arith.constant 0 : index
    %c0_32 = arith.constant 0 : index
    %c0_33 = arith.constant 0 : index
    %105 = vector.load %arg7[%c0_31, %c0_32, %c0_33] : memref<6x8x128xf32, #tpu.memory_space<vmem>>, vector<1x8x128xf32>
    %106 = vector.shape_cast %105 : vector<1x8x128xf32> to vector<8x128xf32>
    %107 = vector.shape_cast %104 : vector<8x128xf32> to vector<1x8x128xf32>
    tpu.vector_store %arg7[%c0_31, %c0_32, %c0_33], %107 {strides = array<i32>} : memref<6x8x128xf32, #tpu.memory_space<vmem>>, vector<1x8x128xf32>,
    %c1_34 = arith.constant 1 : index
    %c0_35 = arith.constant 0 : index
    %c0_36 = arith.constant 0 : index
    %108 = vector.load %arg7[%c1_34, %c0_35, %c0_36] : memref<6x8x128xf32, #tpu.memory_space<vmem>>, vector<1x8x128xf32>
    %109 = vector.shape_cast %108 : vector<1x8x128xf32> to vector<8x128xf32>
    %110 = arith.addf %109, %85 : vector<8x128xf32>
    %c1_37 = arith.constant 1 : index
    %c0_38 = arith.constant 0 : index
    %c0_39 = arith.constant 0 : index
    %111 = vector.load %arg7[%c1_37, %c0_38, %c0_39] : memref<6x8x128xf32, #tpu.memory_space<vmem>>, vector<1x8x128xf32>
    %112 = vector.shape_cast %111 : vector<1x8x128xf32> to vector<8x128xf32>
    %113 = vector.shape_cast %110 : vector<8x128xf32> to vector<1x8x128xf32>
    tpu.vector_store %arg7[%c1_37, %c0_38, %c0_39], %113 {strides = array<i32>} : memref<6x8x128xf32, #tpu.memory_space<vmem>>, vector<1x8x128xf32>,
    %c2 = arith.constant 2 : index
    %c0_40 = arith.constant 0 : index
    %c0_41 = arith.constant 0 : index
    %114 = vector.load %arg7[%c2, %c0_40, %c0_41] : memref<6x8x128xf32, #tpu.memory_space<vmem>>, vector<1x8x128xf32>
    %115 = vector.shape_cast %114 : vector<1x8x128xf32> to vector<8x128xf32>
    %116 = arith.addf %115, %89 : vector<8x128xf32>
    %c2_42 = arith.constant 2 : index
    %c0_43 = arith.constant 0 : index
    %c0_44 = arith.constant 0 : index
    %117 = vector.load %arg7[%c2_42, %c0_43, %c0_44] : memref<6x8x128xf32, #tpu.memory_space<vmem>>, vector<1x8x128xf32>
    %118 = vector.shape_cast %117 : vector<1x8x128xf32> to vector<8x128xf32>
    %119 = vector.shape_cast %116 : vector<8x128xf32> to vector<1x8x128xf32>
    tpu.vector_store %arg7[%c2_42, %c0_43, %c0_44], %119 {strides = array<i32>} : memref<6x8x128xf32, #tpu.memory_space<vmem>>, vector<1x8x128xf32>,
    %c3 = arith.constant 3 : index
    %c0_45 = arith.constant 0 : index
    %c0_46 = arith.constant 0 : index
    %120 = vector.load %arg7[%c3, %c0_45, %c0_46] : memref<6x8x128xf32, #tpu.memory_space<vmem>>, vector<1x8x128xf32>
    %121 = vector.shape_cast %120 : vector<1x8x128xf32> to vector<8x128xf32>
    %122 = arith.addf %121, %93 : vector<8x128xf32>
    %c3_47 = arith.constant 3 : index
    %c0_48 = arith.constant 0 : index
    %c0_49 = arith.constant 0 : index
    %123 = vector.load %arg7[%c3_47, %c0_48, %c0_49] : memref<6x8x128xf32, #tpu.memory_space<vmem>>, vector<1x8x128xf32>
    %124 = vector.shape_cast %123 : vector<1x8x128xf32> to vector<8x128xf32>
    %125 = vector.shape_cast %122 : vector<8x128xf32> to vector<1x8x128xf32>
    tpu.vector_store %arg7[%c3_47, %c0_48, %c0_49], %125 {strides = array<i32>} : memref<6x8x128xf32, #tpu.memory_space<vmem>>, vector<1x8x128xf32>,
    %c4 = arith.constant 4 : index
    %c0_50 = arith.constant 0 : index
    %c0_51 = arith.constant 0 : index
    %126 = vector.load %arg7[%c4, %c0_50, %c0_51] : memref<6x8x128xf32, #tpu.memory_space<vmem>>, vector<1x8x128xf32>
    %127 = vector.shape_cast %126 : vector<1x8x128xf32> to vector<8x128xf32>
    %128 = arith.addf %127, %97 : vector<8x128xf32>
    %c4_52 = arith.constant 4 : index
    %c0_53 = arith.constant 0 : index
    %c0_54 = arith.constant 0 : index
    %129 = vector.load %arg7[%c4_52, %c0_53, %c0_54] : memref<6x8x128xf32, #tpu.memory_space<vmem>>, vector<1x8x128xf32>
    %130 = vector.shape_cast %129 : vector<1x8x128xf32> to vector<8x128xf32>
    %131 = vector.shape_cast %128 : vector<8x128xf32> to vector<1x8x128xf32>
    tpu.vector_store %arg7[%c4_52, %c0_53, %c0_54], %131 {strides = array<i32>} : memref<6x8x128xf32, #tpu.memory_space<vmem>>, vector<1x8x128xf32>,
    %c5 = arith.constant 5 : index
    %c0_55 = arith.constant 0 : index
    %c0_56 = arith.constant 0 : index
    %132 = vector.load %arg7[%c5, %c0_55, %c0_56] : memref<6x8x128xf32, #tpu.memory_space<vmem>>, vector<1x8x128xf32>
    %133 = vector.shape_cast %132 : vector<1x8x128xf32> to vector<8x128xf32>
    %134 = arith.addf %133, %101 : vector<8x128xf32>
    %c5_57 = arith.constant 5 : index
    %c0_58 = arith.constant 0 : index
    %c0_59 = arith.constant 0 : index
    %135 = vector.load %arg7[%c5_57, %c0_58, %c0_59] : memref<6x8x128xf32, #tpu.memory_space<vmem>>, vector<1x8x128xf32>
    %136 = vector.shape_cast %135 : vector<1x8x128xf32> to vector<8x128xf32>
    %137 = vector.shape_cast %134 : vector<8x128xf32> to vector<1x8x128xf32>
    tpu.vector_store %arg7[%c5_57, %c0_58, %c0_59], %137 {strides = array<i32>} : memref<6x8x128xf32, #tpu.memory_space<vmem>>, vector<1x8x128xf32>,
    %c0_i32_60 = arith.constant 0 : i32
    %138 = arith.cmpi eq, %arg1, %c0_i32_60 : i32
    %139 = arith.extui %138 : i1 to i32
    %c0_i32_61 = arith.constant 0 : i32
    %140 = arith.cmpi ne, %139, %c0_i32_61 : i32
    scf.if %140 {
      %c0_62 = arith.constant 0 : index
      %c0_63 = arith.constant 0 : index
      %c0_64 = arith.constant 0 : index
      %141 = vector.load %arg7[%c0_62, %c0_63, %c0_64] : memref<6x8x128xf32, #tpu.memory_space<vmem>>, vector<6x8x128xf32>
      %c0_65 = arith.constant 0 : index
      %c0_66 = arith.constant 0 : index
      %c0_67 = arith.constant 0 : index
      %c0_68 = arith.constant 0 : index
      %142 = vector.load %arg6[%c0_65, %c0_66, %c0_67, %c0_68] : memref<1x6x8x128xf32, #tpu.memory_space<vmem>>, vector<1x6x8x128xf32>
      %143 = vector.shape_cast %142 : vector<1x6x8x128xf32> to vector<6x8x128xf32>
      %144 = vector.shape_cast %141 : vector<6x8x128xf32> to vector<1x6x8x128xf32>
      tpu.vector_store %arg6[%c0_65, %c0_66, %c0_67, %c0_68], %144 {strides = array<i32>} : memref<1x6x8x128xf32, #tpu.memory_space<vmem>>, vector<1x6x8x128xf32>,
    } else {
    }
    return
  }
  func.func @transform_0(%arg0: i32, %arg1: i32) -> i32 {
    %c0_i32 = arith.constant 0 : i32
    %c0_i32_0 = arith.constant 0 : i32
    return %c0_i32 : i32
  }
  func.func @transform_1(%arg0: i32, %arg1: i32) -> i32 {
    %c0_i32 = arith.constant 0 : i32
    %c0_i32_0 = arith.constant 0 : i32
    return %c0_i32 : i32
  }
  func.func @transform_2(%arg0: i32, %arg1: i32) -> (i32, i32) {
    %c1_i32 = arith.constant 1 : i32
    %0 = arith.muli %arg0, %c1_i32 : i32
    %1 = arith.addi %0, %arg1 : i32
    %c0_i32 = arith.constant 0 : i32
    %2 = arith.minsi %1, %c0_i32 : i32
    %c0_i32_0 = arith.constant 0 : i32
    %c0_i32_1 = arith.constant 0 : i32
    return %2, %c0_i32_0 : i32, i32
  }
  func.func @transform_3(%arg0: i32, %arg1: i32) -> (i32, i32) {
    %c1_i32 = arith.constant 1 : i32
    %0 = arith.muli %arg0, %c1_i32 : i32
    %1 = arith.addi %0, %arg1 : i32
    %c0_i32 = arith.constant 0 : i32
    %2 = arith.minsi %1, %c0_i32 : i32
    %c0_i32_0 = arith.constant 0 : i32
    %c0_i32_1 = arith.constant 0 : i32
    return %2, %c0_i32_0 : i32, i32
  }
  func.func @transform_4(%arg0: i32, %arg1: i32) -> (i32, i32, i32, i32) {
    %c0_i32 = arith.constant 0 : i32
    %c0_i32_0 = arith.constant 0 : i32
    %c0_i32_1 = arith.constant 0 : i32
    %c0_i32_2 = arith.constant 0 : i32
    return %arg0, %c0_i32, %c0_i32_0, %c0_i32_1 : i32, i32, i32, i32
  }
}

</mosaic_0001>

<llo_original>
// kernel: tpu_custom_call.1
$region0: #{tpu_custom_call.1}
  #allocation0 [shape = 'u32[]', space=smem, size = 0x4, offset = 0x4, fixed_abs, tag = 'smem constant byte address 0x4 - core index']
  #allocation1 [shape = 'u32[144,128]{1,0:T(1,128)}', space=vmem, size = 0x12000, scoped, tag = 'internal scratch']
  #allocation2 [shape = 'f32[6,8,128]{2,1,0:T(8,128)}', space=vmem, size = 0x6000, scoped, tag = 'scratch operand']
  #allocation3 [shape = 's32[1]{0:T(128)S(6)}', space=smem, size = 0x200, scoped, tag = 'scoped memory for tpu_custom_call.1']
  %s0 = inlined_call_operand.vmem [shape: f32[2], index: 0, kind: input, shape index: {}]
  %s1 = inlined_call_operand.<no memory space> [shape: s32[1], index: 1, kind: input, shape index: {}]
  %s2 = inlined_call_operand.hbm [shape: f32[16,128], index: 2, kind: input, shape index: {}]
  %s3 = inlined_call_operand.hbm [shape: f32[16,128], index: 3, kind: input, shape index: {}]
  %s4 = inlined_call_operand.hbm [shape: f32[2,6,8,128], index: 4, kind: output, shape index: {}]
  %s5 = sld [smem:[#allocation0]]
  $region69: #{tpu_custom_call.1} parent=0
    _
  %s7 = ssub.s32 1, %s5
  %s8 = scalar_select 0, %s7, %s5
  %9 = sst [smem:[#allocation3]] %s1
  $region1: #{tpu_custom_call.1} parent=0
    #allocation4 [shape = 'u8[512]{0}', space=smem, size = 0x200, scoped, tag = 'input window, operand 0, single buffered']
    #allocation5 [shape = 's32[2]{0}', space=sflag, size = 0x8, scoped, tag = 'scoped memory for tpu_custom_call.1']
    #allocation6 [shape = 's32[2]{0}', space=sflag, size = 0x8, scoped, tag = 'scoped memory for tpu_custom_call.1']
    #allocation7 [shape = 's32[2]{0}', space=sflag, size = 0x8, scoped, tag = 'scoped memory for tpu_custom_call.1']
    #allocation8 [shape = 'u8[16384]{0}', space=vmem, size = 0x4000, scoped, tag = 'input window, operand 2']
    #allocation9 [shape = 'u8[16384]{0}', space=vmem, size = 0x4000, scoped, tag = 'input window, operand 3']
    #allocation10 [shape = 's32[2]{0}', space=sflag, size = 0x8, scoped, tag = 'scoped memory for tpu_custom_call.1']
    #allocation11 [shape = 'u8[49152]{0}', space=vmem, size = 0xc000, scoped, tag = 'output window, operand 0']
    %10 = vsyncpa [#allocation7], 0
    %11 = vsyncpa [#allocation5], 0
    %s12 = scalar_lea.sflag [#allocation5], 1
    %13 = vsyncpa %s12, 0
    %14 = vsyncpa [#allocation10], 0
    %s15 = scalar_lea.sflag [#allocation10], 1
    %16 = vsyncpa %s15, 0
    %17 = vsyncpa [#allocation6], 0
    %s18 = scalar_lea.sflag [#allocation6], 1
    %19 = vsyncpa %s18, 0
    loop: start=0, step=1, limit=4
    $region2: #{tpu_custom_call.1} parent=1 // loop_pre_header
      _
    $region3: #{tpu_custom_call.1} parent=1 // loop_header
      %s21 = sphi 0, %s25
      %p22 = scmp.ge.s32.totalorder %s21, 4
      %s28 = sphi 0, %s40
      %s29 = sphi 0, %s36
      %s30 = sphi 0, %s28
      %s31 = sphi 0, %s29
      %s32 = sphi 0, %s30
      %s33 = sphi 0, %s31
      %s41 = sphi 0, %s41
      %s43 = sphi 0, %s41
      %s44 = sphi 0, %s43
      %s58 = sphi 0, %s44
      %s62 = sphi 0, %s62
      %s64 = sphi 0, %s62
      %s65 = sphi 0, %s64
      %s79 = sphi 0, %s65
      %s91 = sphi 0, %s93
      %s94 = sphi 0, %s91
      %s95 = sphi 0, %s94
      %s111 = sphi 0, %s95
      %s123 = sphi 0, %s125
      %s126 = sphi 0, %s123
      %s127 = sphi 0, %s126
      %s143 = sphi 0, %s127
      %s149 = sphi 0, %s151
      %s152 = sphi 0, %s149
      %s153 = sphi 0, %s152
      %s169 = sphi 0, %s153
    $region4: #{tpu_custom_call.1} parent=1 // loop_header_branch
      %24 = sbr.rel (%p22) target = $region8
    $region5: #{tpu_custom_call.1} parent=1 // loop_body
      %s26 = ssub.s32 %s21, 1
      %s27 = ssub.s32 %s21, 2
      %s34 = sadd.s32 1, %s29
      %p35 = scmp.ge.s32.totalorder %s34, 1
      %s36 = scalar_select %p35, 0, %s34
      %s37 = sadd.s32 1, %s28
      %s38 = scalar_select %p35, %s37, %s28
      %p39 = scmp.ge.s32.totalorder %s38, 2
      %s40 = scalar_select %p39, 0, %s38
      %s42 = sadd.s32 %s41, 1
      %p45 = scmp.eq.s32.totalorder %s21, 1
      %p46 = scmp.ne.s32.totalorder %s41, %s43
      %p47 = scmp.eq.s32.totalorder %s21, 0
      %p48 = por %p46, %p47
      %p49 = scmp.ne.s32.totalorder %s41, %s43
      %p50 = scmp.eq.s32.totalorder %s26, 1
      %p51 = por %p49, %p50
      %p52 = scmp.ne.s32.totalorder %s43, %s44
      %p53 = scmp.eq.s32.totalorder %s26, 0
      %p54 = por %p52, %p53
      %p55 = scmp.ne.s32.totalorder %s43, %s44
      %p56 = scmp.eq.s32.totalorder %s27, 1
      %p57 = por %p55, %p56
      %p59 = scmp.ne.s32.totalorder %s44, %s58
      %p60 = scmp.eq.s32.totalorder %s27, 0
      %p61 = por %p59, %p60
      %s63 = sadd.s32 %s62, 1
      %p66 = scmp.eq.s32.totalorder %s21, 1
      %p67 = scmp.ne.s32.totalorder %s62, %s64
      %p68 = scmp.eq.s32.totalorder %s21, 0
      %p69 = por %p67, %p68
      %p70 = scmp.ne.s32.totalorder %s62, %s64
      %p71 = scmp.eq.s32.totalorder %s26, 1
      %p72 = por %p70, %p71
      %p73 = scmp.ne.s32.totalorder %s64, %s65
      %p74 = scmp.eq.s32.totalorder %s26, 0
      %p75 = por %p73, %p74
      %p76 = scmp.ne.s32.totalorder %s64, %s65
      %p77 = scmp.eq.s32.totalorder %s27, 1
      %p78 = por %p76, %p77
      %p80 = scmp.ne.s32.totalorder %s65, %s79
      %p81 = scmp.eq.s32.totalorder %s27, 0
      %p82 = por %p80, %p81
      %s83 = sadd.s32 %s28, %s29
      %p84 = scmp.lt.s32.totalorder %s83, 0
      %s85 = scalar_select %p84, %s83, 0
      %s86 = sadd.s32 %s40, %s36
      %p87 = scmp.lt.s32.totalorder %s86, 0
      %s88 = scalar_select %p87, %s86, 0
      %s89 = ssub.s32 %s85, %s88
      %p90 = scmp.eq.s32.totalorder %s89, 0
      %s92 = sadd.s32 %s91, 1
      %s93 = scalar_select %p90, %s91, %s92
      %p96 = pneg %p90
      %p97 = scmp.eq.s32.totalorder %s21, 1
      %p98 = por %p96, %p97
      %p99 = scmp.ne.s32.totalorder %s91, %s94
      %p100 = scmp.eq.s32.totalorder %s21, 0
      %p101 = por %p99, %p100
      %p102 = scmp.ne.s32.totalorder %s91, %s94
      %p103 = scmp.eq.s32.totalorder %s26, 1
      %p104 = por %p102, %p103
      %p105 = scmp.ne.s32.totalorder %s94, %s95
      %p106 = scmp.eq.s32.totalorder %s26, 0
      %p107 = por %p105, %p106
      %p108 = scmp.ne.s32.totalorder %s94, %s95
      %p109 = scmp.eq.s32.totalorder %s27, 1
      %p110 = por %p108, %p109
      %p112 = scmp.ne.s32.totalorder %s95, %s111
      %p113 = scmp.eq.s32.totalorder %s27, 0
      %p114 = por %p112, %p113
      %s115 = sadd.s32 %s28, %s29
      %p116 = scmp.lt.s32.totalorder %s115, 0
      %s117 = scalar_select %p116, %s115, 0
      %s118 = sadd.s32 %s40, %s36
      %p119 = scmp.lt.s32.totalorder %s118, 0
      %s120 = scalar_select %p119, %s118, 0
      %s121 = ssub.s32 %s117, %s120
      %p122 = scmp.eq.s32.totalorder %s121, 0
      %s124 = sadd.s32 %s123, 1
      %s125 = scalar_select %p122, %s123, %s124
      %p128 = pneg %p122
      %p129 = scmp.eq.s32.totalorder %s21, 1
      %p130 = por %p128, %p129
      %p131 = scmp.ne.s32.totalorder %s123, %s126
      %p132 = scmp.eq.s32.totalorder %s21, 0
      %p133 = por %p131, %p132
      %p134 = scmp.ne.s32.totalorder %s123, %s126
      %p135 = scmp.eq.s32.totalorder %s26, 1
      %p136 = por %p134, %p135
      %p137 = scmp.ne.s32.totalorder %s126, %s127
      %p138 = scmp.eq.s32.totalorder %s26, 0
      %p139 = por %p137, %p138
      %p140 = scmp.ne.s32.totalorder %s126, %s127
      %p141 = scmp.eq.s32.totalorder %s27, 1
      %p142 = por %p140, %p141
      %p144 = scmp.ne.s32.totalorder %s127, %s143
      %p145 = scmp.eq.s32.totalorder %s27, 0
      %p146 = por %p144, %p145
      %s147 = ssub.s32 %s28, %s40
      %p148 = scmp.eq.s32.totalorder %s147, 0
      %s150 = sadd.s32 %s149, 1
      %s151 = scalar_select %p148, %s149, %s150
      %p154 = pneg %p148
      %p155 = scmp.eq.s32.totalorder %s21, 1
      %p156 = por %p154, %p155
      %p157 = scmp.ne.s32.totalorder %s149, %s152
      %p158 = scmp.eq.s32.totalorder %s21, 0
      %p159 = por %p157, %p158
      %p160 = scmp.ne.s32.totalorder %s149, %s152
      %p161 = scmp.eq.s32.totalorder %s26, 1
      %p162 = por %p160, %p161
      %p163 = scmp.ne.s32.totalorder %s152, %s153
      %p164 = scmp.eq.s32.totalorder %s26, 0
      %p165 = por %p163, %p164
      %p166 = scmp.ne.s32.totalorder %s152, %s153
      %p167 = scmp.eq.s32.totalorder %s27, 1
      %p168 = por %p166, %p167
      %p170 = scmp.ne.s32.totalorder %s153, %s169
      %p171 = scmp.eq.s32.totalorder %s27, 0
      %p172 = por %p170, %p171
      %p173 = scmp.le.s32.totalorder 1, %s21
      %p174 = scmp.lt.s32.totalorder %s21, 3
      %p175 = pnand %p173, %p174
      %p176 = pneg %p175
      // Predicated region
      $region9: #{tpu_custom_call.1} parent=5 // pred_check
        _
      $region10: #{tpu_custom_call.1} parent=5 // pred_check_branch
        %178 = sbr.rel (%p175) target = $region12
      $region11: #{tpu_custom_call.1} parent=5 // pred_region
        %s179 = ssub.s32 %s21, 1
        // Predicated region
        $region13: #{tpu_custom_call.1} parent=11 // pred_check
          %p180 = pneg %p54
        $region14: #{tpu_custom_call.1} parent=11 // pred_check_branch
          %182 = sbr.rel (%p180) target = $region16
        $region15: #{tpu_custom_call.1} parent=11 // pred_region
          %s184 = ssub.s32 16, 16
          %185 = vsyncadd [#allocation7], %s184
          %s187 = sshll.u32 %s0, 4
          %s188 = int_to_ptr.vmem [resolvable:$true] %s187
          %190 = dma.vmem_to_smem %s188, 16, [#allocation4], [#allocation7]
        $region16: #{tpu_custom_call.1} parent=11 // pred_fallthru
          _
        // Predicated region
        $region17: #{tpu_custom_call.1} parent=11 // pred_check
          %p191 = pneg %p75
        $region18: #{tpu_custom_call.1} parent=11 // pred_check_branch
          %193 = sbr.rel (%p191) target = $region20
        $region19: #{tpu_custom_call.1} parent=11 // pred_region
          _
        $region20: #{tpu_custom_call.1} parent=11 // pred_fallthru
          _
      $region12: #{tpu_custom_call.1} parent=5 // pred_fallthru
        _
      %p194 = scmp.lt.s32.totalorder %s21, 2
      // Predicated region
      $region21: #{tpu_custom_call.1} parent=5 // pred_check
        %p195 = pneg %p194
      $region22: #{tpu_custom_call.1} parent=5 // pred_check_branch
        %197 = sbr.rel (%p195) target = $region24
      $region23: #{tpu_custom_call.1} parent=5 // pred_region
        // Predicated region
        $region25: #{tpu_custom_call.1} parent=23 // pred_check
          %p198 = pneg %p101
        $region26: #{tpu_custom_call.1} parent=23 // pred_check_branch
          %200 = sbr.rel (%p198) target = $region28
        $region27: #{tpu_custom_call.1} parent=23 // pred_region
          %s201 = sand.u32 %s91, 1
          %s202 = scalar_lea.sflag [#allocation5], %s201
          %s203 = sand.u32 %s91, 1
          %s204 = smul.addr %s203, 16
          %s205 = scalar_lea.vmem [#allocation8], %s204
          %s206 = sadd.s32 %s28, %s29
          %p207 = scmp.lt.s32.totalorder %s206, 0
          %s208 = scalar_select %p207, %s206, 0
          %s209 = smul.u32 2, %s208
          %s211 = ssub.s32 256, 256
          %212 = vsyncadd %s202, %s211
          %s213 = smul.addr %s209, 128
          %s214 = scalar_lea.hbm %s2, %s213
          %s215 = sshll.u32 %s205, 4
          %s216 = int_to_ptr.vmem [resolvable:$true] %s215
          %221 = dma.hbm_to_vmem [thread:$0]  %s214, 256, %s216, %s202, 128, 128, 8
        $region28: #{tpu_custom_call.1} parent=23 // pred_fallthru
          _
        // Predicated region
        $region29: #{tpu_custom_call.1} parent=23 // pred_check
          %p222 = pneg %p133
        $region30: #{tpu_custom_call.1} parent=23 // pred_check_branch
          %224 = sbr.rel (%p222) target = $region32
        $region31: #{tpu_custom_call.1} parent=23 // pred_region
          %s225 = sand.u32 %s123, 1
          %s226 = scalar_lea.sflag [#allocation10], %s225
          %s227 = sand.u32 %s123, 1
          %s228 = smul.addr %s227, 16
          %s229 = scalar_lea.vmem [#allocation9], %s228
          %s230 = sadd.s32 %s28, %s29
          %p231 = scmp.lt.s32.totalorder %s230, 0
          %s232 = scalar_select %p231, %s230, 0
          %s233 = smul.u32 2, %s232
          %s235 = ssub.s32 256, 256
          %236 = vsyncadd %s226, %s235
          %s237 = smul.addr %s233, 128
          %s238 = scalar_lea.hbm %s3, %s237
          %s239 = sshll.u32 %s229, 4
          %s240 = int_to_ptr.vmem [resolvable:$true] %s239
          %245 = dma.hbm_to_vmem [thread:$0]  %s238, 256, %s240, %s226, 128, 128, 8
        $region32: #{tpu_custom_call.1} parent=23 // pred_fallthru
          _
      $region24: #{tpu_custom_call.1} parent=5 // pred_fallthru
        _
      %p246 = scmp.le.s32.totalorder 1, %s21
      %p247 = scmp.lt.s32.totalorder %s21, 3
      %p248 = pnand %p246, %p247
      %p249 = pneg %p248
      // Predicated region
      $region33: #{tpu_custom_call.1} parent=5 // pred_check
        _
      $region34: #{tpu_custom_call.1} parent=5 // pred_check_branch
        %251 = sbr.rel (%p248) target = $region36
      $region35: #{tpu_custom_call.1} parent=5 // pred_region
        %s252 = ssub.s32 %s21, 1
        // Predicated region
        $region37: #{tpu_custom_call.1} parent=35 // pred_check
          %p253 = pneg %p54
        $region38: #{tpu_custom_call.1} parent=35 // pred_check_branch
          %255 = sbr.rel (%p253) target = $region40
        $region39: #{tpu_custom_call.1} parent=35 // pred_region
          %256 = dma.done [#allocation7], 16
        $region40: #{tpu_custom_call.1} parent=35 // pred_fallthru
          _
        %s257 = sand.u32 %s94, 1
        %s258 = scalar_lea.sflag [#allocation5], %s257
        %s259 = sand.u32 %s94, 1
        %s260 = smul.addr %s259, 16
        %s261 = scalar_lea.vmem [#allocation8], %s260
        // Predicated region
        $region41: #{tpu_custom_call.1} parent=35 // pred_check
          %p262 = pneg %p107
        $region42: #{tpu_custom_call.1} parent=35 // pred_check_branch
          %264 = sbr.rel (%p262) target = $region44
        $region43: #{tpu_custom_call.1} parent=35 // pred_region
          %265 = dma.done %s258, 256
        $region44: #{tpu_custom_call.1} parent=35 // pred_fallthru
          _
        %s266 = sand.u32 %s126, 1
        %s267 = scalar_lea.sflag [#allocation10], %s266
        %s268 = sand.u32 %s126, 1
        %s269 = smul.addr %s268, 16
        %s270 = scalar_lea.vmem [#allocation9], %s269
        // Predicated region
        $region45: #{tpu_custom_call.1} parent=35 // pred_check
          %p271 = pneg %p139
        $region46: #{tpu_custom_call.1} parent=35 // pred_check_branch
          %273 = sbr.rel (%p271) target = $region48
        $region47: #{tpu_custom_call.1} parent=35 // pred_region
          %274 = dma.done %s267, 256
        $region48: #{tpu_custom_call.1} parent=35 // pred_fallthru
          _
        %275 = sfence
        %p276 = pneg %p54
        %p277 = pneg %p51
        %p278 = pneg %p75
        %p279 = pneg %p72
        %s280 = sand.u32 %s94, 1
        %s281 = scalar_lea.sflag [#allocation5], %s280
        %s282 = sand.u32 %s94, 1
        %s283 = smul.addr %s282, 16
        %s284 = scalar_lea.vmem [#allocation8], %s283
        %p285 = pneg %p107
        %p286 = pneg %p104
        %s287 = sand.u32 %s126, 1
        %s288 = scalar_lea.sflag [#allocation10], %s287
        %s289 = sand.u32 %s126, 1
        %s290 = smul.addr %s289, 16
        %s291 = scalar_lea.vmem [#allocation9], %s290
        %p292 = pneg %p139
        %p293 = pneg %p136
        %p294 = pneg %p165
        %p295 = pneg %p162
        %s296 = sand.u32 %s152, 1
        %s297 = scalar_lea.sflag [#allocation6], %s296
        %s298 = sand.u32 %s152, 1
        %s299 = smul.addr %s298, 48
        %s300 = scalar_lea.vmem [#allocation11], %s299
        %s301 = sadd.s32 %s30, %s31
        %p302 = scmp.lt.s32.totalorder %s301, 0
        %s303 = scalar_select %p302, %s301, 0
        %s304 = smul.u32 2, %s303
        %s305 = sadd.s32 %s30, %s31
        %p306 = scmp.lt.s32.totalorder %s305, 0
        %s307 = scalar_select %p306, %s305, 0
        %s308 = smul.u32 2, %s307
        %p309 = scmp.eq.s32.totalorder %s31, 0
        // Predicated region
        $region49: #{tpu_custom_call.1} parent=35 // pred_check
          %p310 = pneg %p309
        $region50: #{tpu_custom_call.1} parent=35 // pred_check_branch
          %312 = sbr.rel (%p310) target = $region52
        $region51: #{tpu_custom_call.1} parent=35 // pred_region
          %313 = vst [vmem:[#allocation2] sm:$0xff] 0.0
          %314 = vst [vmem:[#allocation2 + $0x8] sm:$0xff] 0.0
          %315 = vst [vmem:[#allocation2 + $0x10] sm:$0xff] 0.0
          %316 = vst [vmem:[#allocation2 + $0x18] sm:$0xff] 0.0
          %317 = vst [vmem:[#allocation2 + $0x20] sm:$0xff] 0.0
          %318 = vst [vmem:[#allocation2 + $0x28] sm:$0xff] 0.0
        $region52: #{tpu_custom_call.1} parent=35 // pred_fallthru
          _
        %s319 = sld [smem:[#allocation4]]
        %s320 = sld [smem:[#allocation4 + $0x1]]
        %s321 = sadd.s32 %s30, %s31
        %s322 = sld [smem:[#allocation3]]
        %s323 = smul.u32 %s321, 2048
        %s324 = ssub.s32 %s322, %s323
        %v325 = vlaneseq
        %v326 = vshrl.u32 %v325, 7
        %v327 = vmul.u32 %v326, 128
        %v328 = vlaneseq
        %v329 = vand.u32 %v328, 127
        %v330 = vadd.s32 %v327, %v329
        %v331 = vld [vmem:[%s261] sm:$0xff]
        %v332 = vld [vmem:[%s270] sm:$0xff]
        %v333 = vstv %s324
        %vm334 = vcmp.lt.s32.totalorder %v330, %v333
        %v335 = vstv %s319
        %v336 = vsub.f32 %v331, %v335
        %v337 = vsel %vm334, %v336, 0.0
        %v338 = vstv %s320
        %v339 = vsub.f32 %v332, %v338
        %v340 = vsel %vm334, %v339, 0.0
        %v341 = vsub.f32 %v331, %v332
        %v342 = vsel %vm334, %v341, 0.0
        %v343 = vadd.f32 %v337, 0.0
        %v344 = vadd.f32 %v343, 0.0
        %v345 = vadd.f32 %v340, 0.0
        %v346 = vadd.f32 %v345, 0.0
        %v347 = vmul.f32 %v337, %v340
        %v348 = vadd.f32 %v347, 0.0
        %v349 = vadd.f32 %v348, 0.0
        %v350 = vmul.f32 %v337, %v337
        %v351 = vadd.f32 %v350, 0.0
        %v352 = vadd.f32 %v351, 0.0
        %v353 = vmul.f32 %v340, %v340
        %v354 = vadd.f32 %v353, 0.0
        %v355 = vadd.f32 %v354, 0.0
        %v356 = vmul.f32 %v342, %v342
        %v357 = vadd.f32 %v356, 0.0
        %v358 = vadd.f32 %v357, 0.0
        %s359 = scalar_lea.vmem %s261, 8 [#allocation8]
        %v360 = vld [vmem:[%s359] sm:$0xff]
        %s361 = scalar_lea.vmem %s270, 8 [#allocation9]
        %v362 = vld [vmem:[%s361] sm:$0xff]
        %s363 = ssub.s32 %s324, 1024
        %v364 = vstv %s363
        %vm365 = vcmp.lt.s32.totalorder %v330, %v364
        %v366 = vsub.f32 %v360, %v335
        %v367 = vsel %vm365, %v366, 0.0
        %v368 = vsub.f32 %v362, %v338
        %v369 = vsel %vm365, %v368, 0.0
        %v370 = vsub.f32 %v360, %v362
        %v371 = vsel %vm365, %v370, 0.0
        %v372 = vadd.f32 %v367, 0.0
        %v373 = vadd.f32 %v344, %v372
        %v374 = vadd.f32 %v369, 0.0
        %v375 = vadd.f32 %v346, %v374
        %v376 = vmul.f32 %v367, %v369
        %v377 = vadd.f32 %v376, 0.0
        %v378 = vadd.f32 %v349, %v377
        %v379 = vmul.f32 %v367, %v367
        %v380 = vadd.f32 %v379, 0.0
        %v381 = vadd.f32 %v352, %v380
        %v382 = vmul.f32 %v369, %v369
        %v383 = vadd.f32 %v382, 0.0
        %v384 = vadd.f32 %v355, %v383
        %v385 = vmul.f32 %v371, %v371
        %v386 = vadd.f32 %v385, 0.0
        %v387 = vadd.f32 %v358, %v386
        %v388 = vld [vmem:[#allocation2] sm:$0xff]
        %v389 = vadd.f32 %v388, %v373
        %390 = vst [vmem:[#allocation2] sm:$0xff] %v389
        %s391 = scalar_lea.vmem [#allocation2], 8
        %v392 = vld [vmem:[%s391] sm:$0xff]
        %v393 = vadd.f32 %v392, %v375
        %394 = vst [vmem:[%s391] sm:$0xff] %v393
        %s395 = scalar_lea.vmem [#allocation2], 16
        %v396 = vld [vmem:[%s395] sm:$0xff]
        %v397 = vadd.f32 %v396, %v378
        %398 = vst [vmem:[%s395] sm:$0xff] %v397
        %s399 = scalar_lea.vmem [#allocation2], 24
        %v400 = vld [vmem:[%s399] sm:$0xff]
        %v401 = vadd.f32 %v400, %v381
        %402 = vst [vmem:[%s399] sm:$0xff] %v401
        %s403 = scalar_lea.vmem [#allocation2], 32
        %v404 = vld [vmem:[%s403] sm:$0xff]
        %v405 = vadd.f32 %v404, %v384
        %406 = vst [vmem:[%s403] sm:$0xff] %v405
        %s407 = scalar_lea.vmem [#allocation2], 40
        %v408 = vld [vmem:[%s407] sm:$0xff]
        %v409 = vadd.f32 %v408, %v387
        %410 = vst [vmem:[%s407] sm:$0xff] %v409
        // Predicated region
        $region53: #{tpu_custom_call.1} parent=35 // pred_check
          %p411 = pneg %p309
        $region54: #{tpu_custom_call.1} parent=35 // pred_check_branch
          %413 = sbr.rel (%p411) target = $region56
        $region55: #{tpu_custom_call.1} parent=35 // pred_region
          %v414 = vld [vmem:[#allocation2] sm:$0xff]
          %v415 = vld [vmem:[#allocation2 + $0x8] sm:$0xff]
          %v416 = vld [vmem:[#allocation2 + $0x10] sm:$0xff]
          %v417 = vld [vmem:[#allocation2 + $0x18] sm:$0xff]
          %v418 = vld [vmem:[#allocation2 + $0x20] sm:$0xff]
          %v419 = vld [vmem:[#allocation2 + $0x28] sm:$0xff]
          %420 = vst [vmem:[%s300] sm:$0xff] %v414
          %421 = vst [vmem:[%s300 + $0x8] sm:$0xff] %v415
          %422 = vst [vmem:[%s300 + $0x10] sm:$0xff] %v416
          %423 = vst [vmem:[%s300 + $0x18] sm:$0xff] %v417
          %424 = vst [vmem:[%s300 + $0x20] sm:$0xff] %v418
          %425 = vst [vmem:[%s300 + $0x28] sm:$0xff] %v419
        $region56: #{tpu_custom_call.1} parent=35 // pred_fallthru
          _
        %s426 = sand.u32 %s152, 1
        %s427 = scalar_lea.sflag [#allocation6], %s426
        %s428 = sand.u32 %s152, 1
        %s429 = smul.addr %s428, 48
        %s430 = scalar_lea.vmem [#allocation11], %s429
        // Predicated region
        $region57: #{tpu_custom_call.1} parent=35 // pred_check
          %p431 = pneg %p162
        $region58: #{tpu_custom_call.1} parent=35 // pred_check_branch
          %433 = sbr.rel (%p431) target = $region60
        $region59: #{tpu_custom_call.1} parent=35 // pred_region
          %s435 = ssub.s32 768, 768
          %436 = vsyncadd %s427, %s435
          %s437 = smul.addr %s30, 6
          %s438 = smul.addr %s437, 128
          %s439 = scalar_lea.hbm %s4, %s438
          %s440 = sshll.u32 %s430, 4
          %s441 = int_to_ptr.vmem [resolvable:$true] %s440
          %446 = dma.vmem_to_hbm [thread:$0]  %s441, 768, %s439, %s427, 128, 128, 8
        $region60: #{tpu_custom_call.1} parent=35 // pred_fallthru
          _
      $region36: #{tpu_custom_call.1} parent=5 // pred_fallthru
        _
      %p447 = scmp.le.s32.totalorder 2, %s21
      // Predicated region
      $region61: #{tpu_custom_call.1} parent=5 // pred_check
        %p448 = pneg %p447
      $region62: #{tpu_custom_call.1} parent=5 // pred_check_branch
        %450 = sbr.rel (%p448) target = $region64
      $region63: #{tpu_custom_call.1} parent=5 // pred_region
        %s451 = ssub.s32 %s21, 2
        // Predicated region
        $region65: #{tpu_custom_call.1} parent=63 // pred_check
          %p452 = pneg %p168
        $region66: #{tpu_custom_call.1} parent=63 // pred_check_branch
          %454 = sbr.rel (%p452) target = $region68
        $region67: #{tpu_custom_call.1} parent=63 // pred_region
          %s455 = sand.u32 %s153, 1
          %s456 = scalar_lea.sflag [#allocation6], %s455
          %s457 = sand.u32 %s153, 1
          %s458 = smul.addr %s457, 48
          %s459 = scalar_lea.vmem [#allocation11], %s458
          %460 = dma.done %s456, 768
        $region68: #{tpu_custom_call.1} parent=63 // pred_fallthru
          _
      $region64: #{tpu_custom_call.1} parent=5 // pred_fallthru
        _
    $region6: #{tpu_custom_call.1} parent=1 // loop_footer
      %s25 = sadd.s32 1, %s21
    $region7: #{tpu_custom_call.1} parent=1 // loop_footer_branch
      %20 = sbr.rel target = $region3
    $region8: #{tpu_custom_call.1} parent=1 // loop_exit
      _
    %461 = vsyncpa [#allocation5], 1
    %s462 = scalar_lea.sflag [#allocation5], 1
    %463 = vsyncpa %s462, 1
    %464 = vsyncpa [#allocation10], 1
    %s465 = scalar_lea.sflag [#allocation10], 1
    %466 = vsyncpa %s465, 1
    %467 = vsyncpa [#allocation6], 1
    %s468 = scalar_lea.sflag [#allocation6], 1
    %469 = vsyncpa %s468, 1
    %470 = vsyncpa [#allocation7], 1
    %s471 = scalar_lea.sflag [#allocation7], 1
    %472 = vsyncpa %s471, 1

</llo_original>
